<compile_context>
chip_gen: v5e
topology: v5e:2x2
jax: 0.10.0
libtpu: 0.0.40
codegen_flags: <defaults>
</compile_context>

<pallas_src>
import functools

import jax
import jax.numpy as jnp
from jax.experimental import pallas as pl
from jax.experimental.pallas import tpu as pltpu


LANE = 128      # lane width; only the VMEM-resident hidden dim is padded to this
SUBLANE = 8     # f32 sublane granularity for the batch (row) tile


def _round_up(x: int, m: int) -> int:
    return (x + m - 1) // m * m


def mlp_kernel(x_ref, w1_ref, b1_ref, w2_ref, b2_ref, o_ref):
    # Hidden layer: Linear -> ReLU   (MXU matmul, f32 accumulate; VPU epilogue)
    h = jnp.dot(x_ref[...], w1_ref[...], preferred_element_type=jnp.float32)
    h = jnp.maximum(h + b1_ref[...], 0.0)
    # Output layer: Linear -> Tanh   (tanh lowers to the EUP slot -> ~free)
    y = jnp.dot(h, w2_ref[...], preferred_element_type=jnp.float32)
    o_ref[...] = jnp.tanh(y + b2_ref[...]).astype(o_ref.dtype)


def prepare_params(w1, b1, w2, b2):
    """Pad ONLY the hidden dim H to a 128-lane multiple (once, at init).

    H never touches HBM in the kernel's hot path (it lives in the resident
    weights and the in-VMEM intermediate), so its padding is free and keeps the
    second matmul lane-dense.  K (window_size) and C (num_classes) are NOT
    padded, so x / out HBM traffic stays minimal.

    w1: (K, H), b1: (1, H), w2: (H, C), b2: (1, C)
    (weights stored pre-transposed as (in_features, out_features)).
    """
    K, H = w1.shape
    H2, C = w2.shape
    assert H2 == H
    H_pad = _round_up(H, LANE)
    w1_p = jnp.pad(w1, ((0, 0), (0, H_pad - H)))
    b1_p = jnp.pad(b1, ((0, 0), (0, H_pad - H)))
    w2_p = jnp.pad(w2, ((0, H_pad - H), (0, 0)))
    return w1_p, b1_p, w2_p, b2


@functools.partial(jax.jit, static_argnames=("max_tile_b",))
def mlp_forward(x, w1_p, b1_p, w2_p, b2_p, *, max_tile_b=4096):
    """x: (B, window_size) f32. Padded params from prepare_params.

    Returns (B, num_classes) f32, identical to the ReLU/Tanh MLP forward.
    """
    B, K = x.shape
    H_pad = w1_p.shape[1]
    C = w2_p.shape[1]

    # Batch tiling: one grid step whenever B <= max_tile_b; otherwise pick
    # tile_b ~= ceil(B / n_steps) (rounded to sublanes) so the padded tail is
    # at most a few rows rather than most of a tile.
    n_steps = -(-B // max_tile_b)
    tile_b = _round_up(-(-B // n_steps), SUBLANE)
    B_pad = n_steps * tile_b

    x_p = x if B_pad == B else jnp.pad(x, ((0, B_pad - B), (0, 0)))

    out = pl.pallas_call(
        mlp_kernel,
        out_shape=jax.ShapeDtypeStruct((B_pad, C), jnp.float32),
        grid_spec=pltpu.PrefetchScalarGridSpec(
            num_scalar_prefetch=0,
            grid=(n_steps,),
            in_specs=[
                # activations: tiled over the batch axis; last block dim == K
                # (full array dim, legal) -> no K padding in HBM.
                pl.BlockSpec((tile_b, K), lambda i: (i, 0)),
                # weights / biases: resident (same block every grid step);
                # < 20 KiB total, so their buffering cost is immaterial.
                pl.BlockSpec((K, H_pad), lambda i: (0, 0)),
                pl.BlockSpec((1, H_pad), lambda i: (0, 0)),
                pl.BlockSpec((H_pad, C), lambda i: (0, 0)),
                pl.BlockSpec((1, C), lambda i: (0, 0)),
            ],
            # narrow output: last block dim == C (full array dim) -> ~16x less
            # HBM writeback than a 128-lane padded output; the masked store is
            # cheaper than the extra bytes for this mem-bound kernel.
            out_specs=pl.BlockSpec((tile_b, C), lambda i: (i, 0)),
        ),
        compiler_params=pltpu.CompilerParams(
            # parallel vs arbitrary is a near-no-op; the default path is a
            # single grid step, so CORE_PARALLEL (v7x) would not help either.
            dimension_semantics=("arbitrary",),
            # Explicit scoped-VMEM budget: ~3 MiB per step at tile_b=4096,
            # so 32 MiB leaves ample headroom on v5e/v6e/v7x.
            vmem_limit_bytes=32 * 1024 * 1024,
        ),
    )(x_p, w1_p, b1_p, w2_p, b2_p)

    return out if B_pad == B else out[:B]


if __name__ == "__main__":
    # hyperparams implied by the module
    window_size = 16
    hidden_size = 32
    num_classes = 8

    key = jax.random.PRNGKey(0)
    kx, k1, k2, k3, k4, kx2, kx3 = jax.random.split(key, 7)

    # Deterministic parameter init (PyTorch-like uniform scale); weights stored
    # pre-transposed as (in_features, out_features).
    s1 = 1.0 / window_size ** 0.5
    s2 = 1.0 / hidden_size ** 0.5
    w1 = jax.random.uniform(k1, (window_size, hidden_size), jnp.float32, -s1, s1)
    b1 = jax.random.uniform(k2, (1, hidden_size), jnp.float32, -s1, s1)
    w2 = jax.random.uniform(k3, (hidden_size, num_classes), jnp.float32, -s2, s2)
    b2 = jax.random.uniform(k4, (1, num_classes), jnp.float32, -s2, s2)

    # One-time padding of the hidden dim only.
    w1_p, b1_p, w2_p, b2_p = prepare_params(w1, b1, w2, b2)

    def reference_forward(x):
        h = jnp.maximum(x @ w1 + b1, 0.0)
        return jnp.tanh(h @ w2 + b2)

    # --- small batch: single grid step, no batch padding, no wrapper slice ---
    batch = 8
    x = jax.random.normal(kx, (batch, window_size), dtype=jnp.float32)
    out = jax.block_until_ready(mlp_forward(x, w1_p, b1_p, w2_p, b2_p))
    assert out.shape == (batch, num_classes)
    assert jnp.allclose(out, reference_forward(x), atol=1e-5, rtol=1e-5)

    # --- larger batch: still a single grid step at the default max_tile_b ---
    batch2 = 1024
    x2 = jax.random.normal(kx2, (batch2, window_size), dtype=jnp.float32)
    out2 = jax.block_until_ready(mlp_forward(x2, w1_p, b1_p, w2_p, b2_p))
    assert out2.shape == (batch2, num_classes)
    assert jnp.allclose(out2, reference_forward(x2), atol=1e-5, rtol=1e-5)

    # --- correctness check of the multi-step / ragged-tail grid path
    #     (small max_tile_b only to exercise the grid; not the perf config) ---
    batch3 = 1000
    x3 = jax.random.normal(kx3, (batch3, window_size), dtype=jnp.float32)
    out3 = jax.block_until_ready(
        mlp_forward(x3, w1_p, b1_p, w2_p, b2_p, max_tile_b=256))
    assert out3.shape == (batch3, num_classes)
    assert jnp.allclose(out3, reference_forward(x3), atol=1e-5, rtol=1e-5)

    print("KERNEL_OK")
</pallas_src>

<mosaic_0001>
module attributes {stable_mosaic.version = 11 : i64} {
  func.func @mlp_kernel(%arg0: i32, %arg1: memref<8x16xf32, #tpu.memory_space<vmem>>, %arg2: memref<16x128xf32, #tpu.memory_space<vmem>>, %arg3: memref<1x128xf32, #tpu.memory_space<vmem>>, %arg4: memref<128x8xf32, #tpu.memory_space<vmem>>, %arg5: memref<1x8xf32, #tpu.memory_space<vmem>>, %arg6: memref<8x8xf32, #tpu.memory_space<vmem>>) attributes {dimension_semantics = [#tpu.dimension_semantics<arbitrary>], iteration_bounds = array<i64: 1>, scalar_prefetch = 0 : i64, scratch_operands = 0 : i64, tpu.core_type = #tpu.core_type<tc>, window_params = [{transform_indices = @transform_0, window_bounds = array<i64: 8, 16>}, {pipeline_mode = #tpu.pipeline_mode<synchronous>, transform_indices = @transform_1, window_bounds = array<i64: 16, 128>}, {pipeline_mode = #tpu.pipeline_mode<synchronous>, transform_indices = @transform_2, window_bounds = array<i64: 1, 128>}, {pipeline_mode = #tpu.pipeline_mode<synchronous>, transform_indices = @transform_3, window_bounds = array<i64: 128, 8>}, {pipeline_mode = #tpu.pipeline_mode<synchronous>, transform_indices = @transform_4, window_bounds = array<i64: 1, 8>}, {transform_indices = @transform_5, window_bounds = array<i64: 8, 8>}]} {
    %c0 = arith.constant 0 : index
    %c0_0 = arith.constant 0 : index
    %0 = vector.load %arg1[%c0, %c0_0] : memref<8x16xf32, #tpu.memory_space<vmem>>, vector<8x16xf32>
    %c0_1 = arith.constant 0 : index
    %c0_2 = arith.constant 0 : index
    %1 = vector.load %arg2[%c0_1, %c0_2] : memref<16x128xf32, #tpu.memory_space<vmem>>, vector<16x128xf32>
    %cst = arith.constant dense<0.000000e+00> : vector<8x128xf32>
    %2 = tpu.matmul %0, %1, %cst {dimension_numbers = #tpu.dot_dimension_numbers<[1], [0], [0], [1], [0, 0, 1, 1], [], []>} : vector<8x16xf32>, vector<16x128xf32>, vector<8x128xf32> -> vector<8x128xf32>
    %c0_3 = arith.constant 0 : index
    %c0_4 = arith.constant 0 : index
    %3 = vector.load %arg3[%c0_3, %c0_4] : memref<1x128xf32, #tpu.memory_space<vmem>>, vector<1x128xf32>
    %4 = vector.broadcast %3 : vector<1x128xf32> to vector<8x128xf32>
    %5 = arith.addf %2, %4 : vector<8x128xf32>
    %cst_5 = arith.constant 0.000000e+00 : f32
    %6 = vector.broadcast %cst_5 : f32 to vector<8x128xf32>
    %7 = arith.maximumf %5, %6 : vector<8x128xf32>
    %c0_6 = arith.constant 0 : index
    %c0_7 = arith.constant 0 : index
    %8 = vector.load %arg4[%c0_6, %c0_7] : memref<128x8xf32, #tpu.memory_space<vmem>>, vector<128x8xf32>
    %cst_8 = arith.constant dense<0.000000e+00> : vector<8x8xf32>
    %9 = tpu.matmul %7, %8, %cst_8 {dimension_numbers = #tpu.dot_dimension_numbers<[1], [0], [0], [1], [0, 0, 1, 1], [], []>} : vector<8x128xf32>, vector<128x8xf32>, vector<8x8xf32> -> vector<8x8xf32>
    %c0_9 = arith.constant 0 : index
    %c0_10 = arith.constant 0 : index
    %10 = vector.load %arg5[%c0_9, %c0_10] : memref<1x8xf32, #tpu.memory_space<vmem>>, vector<1x8xf32>
    %11 = vector.broadcast %10 : vector<1x8xf32> to vector<8x8xf32>
    %12 = arith.addf %9, %11 : vector<8x8xf32>
    %13 = math.tanh %12 : vector<8x8xf32>
    %c0_11 = arith.constant 0 : index
    %c0_12 = arith.constant 0 : index
    %14 = vector.load %arg6[%c0_11, %c0_12] : memref<8x8xf32, #tpu.memory_space<vmem>>, vector<8x8xf32>
    tpu.vector_store %arg6[%c0_11, %c0_12], %13 {strides = array<i32>} : memref<8x8xf32, #tpu.memory_space<vmem>>, vector<8x8xf32>,
    return
  }
  func.func @transform_0(%arg0: i32) -> (i32, i32) {
    %c0_i32 = arith.constant 0 : i32
    %c0_i32_0 = arith.constant 0 : i32
    return %arg0, %c0_i32 : i32, i32
  }
  func.func @transform_1(%arg0: i32) -> (i32, i32) {
    %c0_i32 = arith.constant 0 : i32
    %c0_i32_0 = arith.constant 0 : i32
    %c0_i32_1 = arith.constant 0 : i32
    return %c0_i32, %c0_i32_0 : i32, i32
  }
  func.func @transform_2(%arg0: i32) -> (i32, i32) {
    %c0_i32 = arith.constant 0 : i32
    %c0_i32_0 = arith.constant 0 : i32
    %c0_i32_1 = arith.constant 0 : i32
    return %c0_i32, %c0_i32_0 : i32, i32
  }
  func.func @transform_3(%arg0: i32) -> (i32, i32) {
    %c0_i32 = arith.constant 0 : i32
    %c0_i32_0 = arith.constant 0 : i32
    %c0_i32_1 = arith.constant 0 : i32
    return %c0_i32, %c0_i32_0 : i32, i32
  }
  func.func @transform_4(%arg0: i32) -> (i32, i32) {
    %c0_i32 = arith.constant 0 : i32
    %c0_i32_0 = arith.constant 0 : i32
    %c0_i32_1 = arith.constant 0 : i32
    return %c0_i32, %c0_i32_0 : i32, i32
  }
  func.func @transform_5(%arg0: i32) -> (i32, i32) {
    %c0_i32 = arith.constant 0 : i32
    %c0_i32_0 = arith.constant 0 : i32
    return %arg0, %c0_i32 : i32, i32
  }
}

</mosaic_0001>

<llo_original>
// kernel: mlp_forward.1
$region0: #{mlp_forward.1}
  #allocation0 [shape = 'u32[]', space=smem, size = 0x4, offset = 0x4, fixed_abs, tag = 'smem constant byte address 0x4 - core index']
  #allocation1 [shape = 'u32[72,128]{1,0:T(1,128)}', space=vmem, size = 0x9000, scoped, tag = 'internal scratch']
  %s0 = inlined_call_operand.vmem [shape: f32[8,16], index: 0, kind: input, shape index: {}]
  %s1 = inlined_call_operand.vmem [shape: f32[16,128], index: 1, kind: input, shape index: {}]
  %s2 = inlined_call_operand.vmem [shape: f32[1,128], index: 2, kind: input, shape index: {}]
  %s3 = inlined_call_operand.vmem [shape: f32[128,8], index: 3, kind: input, shape index: {}]
  %s4 = inlined_call_operand.vmem [shape: f32[1,8], index: 4, kind: input, shape index: {}]
  %s5 = inlined_call_operand.hbm [shape: f32[8,8], index: 5, kind: output, shape index: {}]
  %s6 = sld [smem:[#allocation0]]
  $region30: #{mlp_forward.1} parent=0
    _
  %s8 = ssub.s32 1, %s6
  %s9 = scalar_select 0, %s8, %s6
  $region1: #{mlp_forward.1} parent=0
    #allocation2 [shape = 'u8[4096]{0}', space=vmem, size = 0x1000, scoped, tag = 'output window, operand 0, single buffered']
    #allocation3 [shape = 's32[1]{0}', space=sflag, size = 0x4, scoped, tag = 'scoped memory for mlp_forward.1']
    %10 = vsyncpa [#allocation3], 0
    // Predicated region
    $region2: #{mlp_forward.1} parent=1 // pred_check
      _
    $region3: #{mlp_forward.1} parent=1 // pred_check_branch
      %12 = sbr.rel (0) target = $region5
    $region4: #{mlp_forward.1} parent=1 // pred_region
      _
    $region5: #{mlp_forward.1} parent=1 // pred_fallthru
      _
    // Predicated region
    $region6: #{mlp_forward.1} parent=1 // pred_check
      _
    $region7: #{mlp_forward.1} parent=1 // pred_check_branch
      %14 = sbr.rel (0) target = $region9
    $region8: #{mlp_forward.1} parent=1 // pred_region
      _
    $region9: #{mlp_forward.1} parent=1 // pred_fallthru
      _
    // Predicated region
    $region10: #{mlp_forward.1} parent=1 // pred_check
      _
    $region11: #{mlp_forward.1} parent=1 // pred_check_branch
      %16 = sbr.rel (0) target = $region13
    $region12: #{mlp_forward.1} parent=1 // pred_region
      _
    $region13: #{mlp_forward.1} parent=1 // pred_fallthru
      _
    // Predicated region
    $region14: #{mlp_forward.1} parent=1 // pred_check
      _
    $region15: #{mlp_forward.1} parent=1 // pred_check_branch
      %18 = sbr.rel (0) target = $region17
    $region16: #{mlp_forward.1} parent=1 // pred_region
      _
    $region17: #{mlp_forward.1} parent=1 // pred_fallthru
      _
    // Predicated region
    $region18: #{mlp_forward.1} parent=1 // pred_check
      _
    $region19: #{mlp_forward.1} parent=1 // pred_check_branch
      %20 = sbr.rel (0) target = $region21
    $region20: #{mlp_forward.1} parent=1 // pred_region
      _
    $region21: #{mlp_forward.1} parent=1 // pred_fallthru
      _
    %v21 = vld [vmem:[%s0] sm:$0xff]
    %v22 = vld [vmem:[%s1] sm:$0xff]
    %v23 = vld [vmem:[%s1 + $0x8] sm:$0xff]
    %v24 = vld [vmem:[%s2] sm:$0x1]
    %v26 = vperm.slane %v24, 0
    %vm28 = vcmask 130048
    %v30 = vsel %vm28, %v21, 0
    %32 = vmatpush.msra.mxu0 0.0
    %33 = vmatpush.msra.mxu0 0.0
    %34 = vmatpush.msra.mxu0 0.0
    %35 = vmatpush.msra.mxu0 0.0
    %36 = vmatpush.msra.mxu0 0.0
    %37 = vmatpush.msra.mxu0 0.0
    %38 = vmatpush.msra.mxu0 0.0
    %39 = vmatpush.msra.mxu0 0.0
    %40 = vmatpush.msra.mxu0 0.0
    %41 = vmatpush.msra.mxu0 0.0
    %42 = vmatpush.msra.mxu0 0.0
    %43 = vmatpush.msra.mxu0 0.0
    %44 = vmatpush.msra.mxu0 0.0
    %45 = vmatpush.msra.mxu0 0.0
    %46 = vmatpush.msra.mxu0 %v23
    %47 = vmatpush.msra.mxu0 %v22
    %48 = vmatmul.f32.gmra.mxu0 %v30
    %v49 = vpop.f32.mrf.mxu0
    %v50 = vadd.f32 %v26, %v49
    %51 = vdwg.mxu0
    %v52 = vmax.f32 %v50, 0.0
    %v53 = vld [vmem:[%s3] sm:$0xff]
    %v54 = vld [vmem:[%s3 + $0x8] sm:$0xff]
    %v55 = vld [vmem:[%s3 + $0x10] sm:$0xff]
    %v56 = vld [vmem:[%s3 + $0x18] sm:$0xff]
    %v57 = vld [vmem:[%s3 + $0x20] sm:$0xff]
    %v58 = vld [vmem:[%s3 + $0x28] sm:$0xff]
    %v59 = vld [vmem:[%s3 + $0x30] sm:$0xff]
    %v60 = vld [vmem:[%s3 + $0x38] sm:$0xff]
    %v61 = vld [vmem:[%s3 + $0x40] sm:$0xff]
    %v62 = vld [vmem:[%s3 + $0x48] sm:$0xff]
    %v63 = vld [vmem:[%s3 + $0x50] sm:$0xff]
    %v64 = vld [vmem:[%s3 + $0x58] sm:$0xff]
    %v65 = vld [vmem:[%s3 + $0x60] sm:$0xff]
    %v66 = vld [vmem:[%s3 + $0x68] sm:$0xff]
    %v67 = vld [vmem:[%s3 + $0x70] sm:$0xff]
    %v68 = vld [vmem:[%s3 + $0x78] sm:$0xff]
    %v69 = vld [vmem:[%s4] sm:$0x1]
    %v71 = vperm.slane %v69, 0
    %73 = vmatpush.msra.mxu0 %v68
    %74 = vmatpush.msra.mxu0 %v67
    %75 = vmatpush.msra.mxu0 %v66
    %76 = vmatpush.msra.mxu0 %v65
    %77 = vmatpush.msra.mxu0 %v64
    %78 = vmatpush.msra.mxu0 %v63
    %79 = vmatpush.msra.mxu0 %v62
    %80 = vmatpush.msra.mxu0 %v61
    %81 = vmatpush.msra.mxu0 %v60
    %82 = vmatpush.msra.mxu0 %v59
    %83 = vmatpush.msra.mxu0 %v58
    %84 = vmatpush.msra.mxu0 %v57
    %85 = vmatpush.msra.mxu0 %v56
    %86 = vmatpush.msra.mxu0 %v55
    %87 = vmatpush.msra.mxu0 %v54
    %88 = vmatpush.msra.mxu0 %v53
    %89 = vmatmul.f32.gmra.mxu0 %v52
    %v90 = vpop.f32.mrf.mxu0
    %v91 = vadd.f32 %v71, %v90
    %92 = vdwg.mxu0
    %v93 = vtanh.pop %v91
    %vm94 = vcmask 64512
    %95 = vst.msk [vmem:[#allocation2] sm:$0xff] %vm94, %v93
    // Predicated region
    $region22: #{mlp_forward.1} parent=1 // pred_check
      _
    $region23: #{mlp_forward.1} parent=1 // pred_check_branch
      %97 = sbr.rel (0) target = $region25
    $region24: #{mlp_forward.1} parent=1 // pred_region
      %99 = vsyncadd [#allocation3], 0
      %s101 = sshll.u32 [#allocation2], 4
      %s102 = int_to_ptr.vmem [resolvable:$true] %s101
      %s103 = sshll.u32 %s5, 4
      %s104 = int_to_ptr.hbm [resolvable:$true] %s103
      %106 = dma.vmem_to_hbm [thread:$0]  %s102, 128, %s104, [#allocation3]
    $region25: #{mlp_forward.1} parent=1 // pred_fallthru
      _
    // Predicated region
    $region26: #{mlp_forward.1} parent=1 // pred_check
      _
    $region27: #{mlp_forward.1} parent=1 // pred_check_branch
      %108 = sbr.rel (0) target = $region29
    $region28: #{mlp_forward.1} parent=1 // pred_region
      %110 = dma.done [#allocation3], 128
    $region29: #{mlp_forward.1} parent=1 // pred_fallthru
      _
    %111 = vsyncpa [#allocation3], 1

</llo_original>
